<compile_context>
chip_gen: v7x
topology: tpu7x:2x2x1
jax: 0.10.0
libtpu: 0.0.40
codegen_flags: <defaults>
</compile_context>

<pallas_src>
import functools

import jax
import jax.numpy as jnp
from jax.experimental import pallas as pl
from jax.experimental.pallas import tpu as pltpu


def _res_dwconv_bn_kernel(x_ref, w_ref, b_ref, wcol_ref, o_ref, *, H, W):
    # x_ref:    (R, H*W)   rows = flattened (batch, channel); lanes = pixels
    # w_ref:    (R, 9)     depthwise weights (BN scale folded), row-aligned with x
    # b_ref:    (R, 1)     folded BN bias  (beta - mean * gamma / sqrt(var+eps))
    # wcol_ref: (1, H*W)   int32 column index (p mod W) of every flat pixel
    # o_ref:    (R, H*W)
    HW = H * W

    x = x_ref[...].astype(jnp.float32)            # single HBM read of the tile
    wts = w_ref[...].astype(jnp.float32)          # (R, 9)
    bias = b_ref[...].astype(jnp.float32)         # (R, 1)

    col = wcol_ref[...]                           # (1, HW)
    pos = jax.lax.broadcasted_iota(jnp.int32, (1, HW), 1)
    not_left = col >= 1                           # column w-1 exists
    not_right = col <= W - 2                      # column w+1 exists
    not_top = pos >= W                            # row h-1 exists
    not_bot = pos < HW - W                        # row h+1 exists

    # Row bases via XLU rotations: out[p] = x[p - W] / x[p + W]; positions
    # where the rotation wrapped across the image border are zeroed once.
    up = jnp.where(not_top, pltpu.roll(x, W, axis=1), 0.0)            # (h-1, w)
    down = jnp.where(not_bot, pltpu.roll(x, HW - W, axis=1), 0.0)     # (h+1, w)

    def wk(t):                                    # per-row tap weight, (R, 1)
        return wts[:, t:t + 1]

    # Three column-partial sums (kw = 1 / 0 / 2); tap index t = kh*3 + kw.
    mid_sum = wk(1) * up + wk(4) * x + wk(7) * down
    left_sum = wk(0) * up + wk(3) * x + wk(6) * down
    right_sum = wk(2) * up + wk(5) * x + wk(8) * down

    # Residual + folded BN bias seed the accumulator; one roll + one select
    # per column side instead of per tap.
    acc = (x + bias) + mid_sum
    acc = acc + jnp.where(not_left, pltpu.roll(left_sum, 1, axis=1), 0.0)
    acc = acc + jnp.where(not_right, pltpu.roll(right_sum, HW - 1, axis=1), 0.0)
    o_ref[...] = acc.astype(o_ref.dtype)          # lane-dense store


def _vmem_capacity_bytes():
    try:
        return int(pltpu.get_tpu_info().vmem_capacity_bytes)
    except Exception:
        return 64 << 20          # conservative fallback = v7x per-core VMEM


def _pick_row_block(n_rows, hw, itemsize, vmem_cap):
    """Largest multiple-of-8 row block that divides n_rows, keeps the pipelined
    working set within a per-generation budget, and prefers >=4 grid steps
    (v7x has 2 TensorCores that both need work)."""
    ws_cap = min(vmem_cap // 2, 48 << 20)          # in+out double buffers + temps
    row_bytes = hw * itemsize
    block_cap = max(row_bytes, min(2 << 20, ws_cap // 4))
    cap_rows = max(1, block_cap // row_bytes)

    legal = [r for r in range(8, n_rows + 1, 8)
             if n_rows % r == 0 and r <= cap_rows]
    deep = [r for r in legal if n_rows // r >= 4]
    if deep:
        return max(deep)
    if legal:
        return max(legal)
    return n_rows    # whole array is always a legal block shape (small/odd N)


@jax.jit
def residual_dwconv_bn(x_nchw, w_dw, bn_gamma, bn_beta, bn_mean, bn_var, bn_eps=1e-5):
    """x_nchw: (B, C, H, W); w_dw: (C, 3, 3) depthwise weights (groups == C)."""
    B, C, H, W = x_nchw.shape
    HW = H * W
    N = B * C
    itemsize = jnp.dtype(x_nchw.dtype).itemsize

    # ---- glue (free reshapes + O(C) math): BN folding, row-aligned params ----
    scale = bn_gamma / jnp.sqrt(bn_var + bn_eps)                          # (C,)
    bias_c = (bn_beta - bn_mean * scale).reshape(C, 1).astype(jnp.float32)
    w9_c = (w_dw.reshape(C, 9) * scale[:, None]).astype(jnp.float32)

    x_rows = x_nchw.reshape(N, HW)                                        # free (row-major)
    w_rows = jnp.tile(w9_c, (B, 1))                                       # (N, 9)  tiny
    b_rows = jnp.tile(bias_c, (B, 1))                                     # (N, 1)  tiny
    wcol = (jnp.arange(HW, dtype=jnp.int32) % W).reshape(1, HW)

    vmem_cap = _vmem_capacity_bytes()
    R = _pick_row_block(N, HW, itemsize, vmem_cap)

    blk_io = R * HW * itemsize
    blk_f32 = R * HW * 4
    # 2x double-buffered in + out blocks, ~8 f32 compute temporaries, slack.
    vmem_limit = int(min(max(4 * blk_io + 8 * blk_f32 + (2 << 20), 32 << 20),
                         int(vmem_cap * 0.9)))

    out_rows = pl.pallas_call(
        functools.partial(_res_dwconv_bn_kernel, H=H, W=W),
        out_shape=jax.ShapeDtypeStruct((N, HW), x_nchw.dtype),
        grid_spec=pltpu.PrefetchScalarGridSpec(
            num_scalar_prefetch=0,
            grid=(N // R,),
            in_specs=[
                pl.BlockSpec((R, HW), lambda g: (g, 0)),
                pl.BlockSpec((R, 9), lambda g: (g, 0)),
                pl.BlockSpec((R, 1), lambda g: (g, 0)),
                pl.BlockSpec((1, HW), lambda g: (0, 0)),
            ],
            out_specs=pl.BlockSpec((R, HW), lambda g: (g, 0)),
        ),
        compiler_params=pltpu.CompilerParams(
            dimension_semantics=("parallel",),
            vmem_limit_bytes=vmem_limit),
    )(x_rows, w_rows, b_rows, wcol)

    return out_rows.reshape(B, C, H, W)                                   # free reshape back


def _reference(x_nchw, w_dw, bn_gamma, bn_beta, bn_mean, bn_var, bn_eps=1e-5):
    """Pure-JAX reference: x + BN(depthwise_conv3x3(x)), NCHW."""
    C = x_nchw.shape[1]
    w = w_dw.reshape(C, 1, 3, 3)                                          # OIHW, depthwise
    conv = jax.lax.conv_general_dilated(
        x_nchw, w, window_strides=(1, 1), padding=((1, 1), (1, 1)),
        dimension_numbers=("NCHW", "OIHW", "NCHW"),
        feature_group_count=C)
    scale = (bn_gamma / jnp.sqrt(bn_var + bn_eps)).reshape(1, C, 1, 1)
    bias = (bn_beta - bn_mean * bn_gamma / jnp.sqrt(bn_var + bn_eps)).reshape(1, C, 1, 1)
    return x_nchw + conv * scale + bias


if __name__ == "__main__":
    key = jax.random.PRNGKey(0)
    k_x, k_w, k_m, k_v = jax.random.split(key, 4)

    B, C, H, W = 2, 4, 16, 16
    x = jax.random.normal(k_x, (B, C, H, W), dtype=jnp.float32)

    # Conv2d(C, C, 3, stride=1, pad=1, groups=C, bias=False): weight (C, 1, 3, 3).
    w_dw = jax.random.normal(k_w, (C, 3, 3), dtype=jnp.float32) * 0.1
    # BatchNorm2d(C) per Conv2d_BN.__init__ (weight=1, bias=0); non-trivial
    # running stats so the BN-folding path is exercised.
    bn_gamma = jnp.ones((C,), jnp.float32)
    bn_beta = jnp.zeros((C,), jnp.float32)
    bn_mean = 0.1 * jax.random.normal(k_m, (C,), dtype=jnp.float32)
    bn_var = 1.0 + 0.1 * jax.random.normal(k_v, (C,), dtype=jnp.float32) ** 2

    out = residual_dwconv_bn(x, w_dw, bn_gamma, bn_beta, bn_mean, bn_var)
    out = jax.block_until_ready(out)

    ref = _reference(x, w_dw, bn_gamma, bn_beta, bn_mean, bn_var)
    assert out.shape == (B, C, H, W)
    assert jnp.allclose(out, ref, atol=1e-5, rtol=1e-5), "mismatch vs reference"

    print("KERNEL_OK")
</pallas_src>

<mosaic_0001>
module attributes {stable_mosaic.version = 11 : i64} {
  func.func @_res_dwconv_bn_kernel(%arg0: i32, %arg1: memref<8x256xf32, #tpu.memory_space<vmem>>, %arg2: memref<8x9xf32, #tpu.memory_space<vmem>>, %arg3: memref<8x1xf32, #tpu.memory_space<vmem>>, %arg4: memref<1x256xi32, #tpu.memory_space<vmem>>, %arg5: memref<8x256xf32, #tpu.memory_space<vmem>>) attributes {dimension_semantics = [#tpu.dimension_semantics<parallel>], iteration_bounds = array<i64: 1>, scalar_prefetch = 0 : i64, scratch_operands = 0 : i64, tpu.core_type = #tpu.core_type<tc>, window_params = [{transform_indices = @transform_0, window_bounds = array<i64: 8, 256>}, {transform_indices = @transform_1, window_bounds = array<i64: 8, 9>}, {transform_indices = @transform_2, window_bounds = array<i64: 8, 1>}, {pipeline_mode = #tpu.pipeline_mode<synchronous>, transform_indices = @transform_3, window_bounds = array<i64: 1, 256>}, {transform_indices = @transform_4, window_bounds = array<i64: 8, 256>}]} {
    %c0 = arith.constant 0 : index
    %c0_0 = arith.constant 0 : index
    %0 = vector.load %arg1[%c0, %c0_0] : memref<8x256xf32, #tpu.memory_space<vmem>>, vector<8x256xf32>
    %c0_1 = arith.constant 0 : index
    %c0_2 = arith.constant 0 : index
    %1 = vector.load %arg2[%c0_1, %c0_2] : memref<8x9xf32, #tpu.memory_space<vmem>>, vector<8x9xf32>
    %c0_3 = arith.constant 0 : index
    %c0_4 = arith.constant 0 : index
    %2 = vector.load %arg3[%c0_3, %c0_4] : memref<8x1xf32, #tpu.memory_space<vmem>>, vector<8x1xf32>
    %c0_5 = arith.constant 0 : index
    %c0_6 = arith.constant 0 : index
    %3 = vector.load %arg4[%c0_5, %c0_6] : memref<1x256xi32, #tpu.memory_space<vmem>>, vector<1x256xi32>
    %4 = tpu.iota {dimensions = array<i32: 1>} : vector<1x256xi32>
    %c1_i32 = arith.constant 1 : i32
    %5 = vector.broadcast %c1_i32 : i32 to vector<1x256xi32>
    %6 = arith.cmpi sge, %3, %5 : vector<1x256xi32>
    %c14_i32 = arith.constant 14 : i32
    %7 = vector.broadcast %c14_i32 : i32 to vector<1x256xi32>
    %8 = arith.cmpi sle, %3, %7 : vector<1x256xi32>
    %c16_i32 = arith.constant 16 : i32
    %9 = vector.broadcast %c16_i32 : i32 to vector<1x256xi32>
    %10 = arith.cmpi sge, %4, %9 : vector<1x256xi32>
    %c240_i32 = arith.constant 240 : i32
    %11 = vector.broadcast %c240_i32 : i32 to vector<1x256xi32>
    %12 = arith.cmpi slt, %4, %11 : vector<1x256xi32>
    %c16_i32_7 = arith.constant 16 : i32
    %13 = tpu.dynamic_rotate %0 by %c16_i32_7 dim 1 : vector<8x256xf32>, i32 -> vector<8x256xf32>
    %cst = arith.constant 0.000000e+00 : f32
    %14 = vector.shape_cast %10 : vector<1x256xi1> to vector<1x256xi1>
    %15 = vector.broadcast %14 : vector<1x256xi1> to vector<8x256xi1>
    %16 = vector.broadcast %cst : f32 to vector<8x256xf32>
    %17 = arith.select %15, %13, %16 : vector<8x256xi1>, vector<8x256xf32>
    %c240_i32_8 = arith.constant 240 : i32
    %18 = tpu.dynamic_rotate %0 by %c240_i32_8 dim 1 : vector<8x256xf32>, i32 -> vector<8x256xf32>
    %cst_9 = arith.constant 0.000000e+00 : f32
    %19 = vector.shape_cast %12 : vector<1x256xi1> to vector<1x256xi1>
    %20 = vector.broadcast %19 : vector<1x256xi1> to vector<8x256xi1>
    %21 = vector.broadcast %cst_9 : f32 to vector<8x256xf32>
    %22 = arith.select %20, %18, %21 : vector<8x256xi1>, vector<8x256xf32>
    %23 = vector.extract_strided_slice %1 {offsets = [0, 1], sizes = [8, 1], strides = [1, 1]} : vector<8x9xf32> to vector<8x1xf32>
    %24 = vector.broadcast %23 : vector<8x1xf32> to vector<8x256xf32>
    %25 = arith.mulf %24, %17 : vector<8x256xf32>
    %26 = vector.extract_strided_slice %1 {offsets = [0, 4], sizes = [8, 1], strides = [1, 1]} : vector<8x9xf32> to vector<8x1xf32>
    %27 = vector.broadcast %26 : vector<8x1xf32> to vector<8x256xf32>
    %28 = arith.mulf %27, %0 : vector<8x256xf32>
    %29 = arith.addf %25, %28 : vector<8x256xf32>
    %30 = vector.extract_strided_slice %1 {offsets = [0, 7], sizes = [8, 1], strides = [1, 1]} : vector<8x9xf32> to vector<8x1xf32>
    %31 = vector.broadcast %30 : vector<8x1xf32> to vector<8x256xf32>
    %32 = arith.mulf %31, %22 : vector<8x256xf32>
    %33 = arith.addf %29, %32 : vector<8x256xf32>
    %34 = vector.extract_strided_slice %1 {offsets = [0, 0], sizes = [8, 1], strides = [1, 1]} : vector<8x9xf32> to vector<8x1xf32>
    %35 = vector.broadcast %34 : vector<8x1xf32> to vector<8x256xf32>
    %36 = arith.mulf %35, %17 : vector<8x256xf32>
    %37 = vector.extract_strided_slice %1 {offsets = [0, 3], sizes = [8, 1], strides = [1, 1]} : vector<8x9xf32> to vector<8x1xf32>
    %38 = vector.broadcast %37 : vector<8x1xf32> to vector<8x256xf32>
    %39 = arith.mulf %38, %0 : vector<8x256xf32>
    %40 = arith.addf %36, %39 : vector<8x256xf32>
    %41 = vector.extract_strided_slice %1 {offsets = [0, 6], sizes = [8, 1], strides = [1, 1]} : vector<8x9xf32> to vector<8x1xf32>
    %42 = vector.broadcast %41 : vector<8x1xf32> to vector<8x256xf32>
    %43 = arith.mulf %42, %22 : vector<8x256xf32>
    %44 = arith.addf %40, %43 : vector<8x256xf32>
    %45 = vector.extract_strided_slice %1 {offsets = [0, 2], sizes = [8, 1], strides = [1, 1]} : vector<8x9xf32> to vector<8x1xf32>
    %46 = vector.broadcast %45 : vector<8x1xf32> to vector<8x256xf32>
    %47 = arith.mulf %46, %17 : vector<8x256xf32>
    %48 = vector.extract_strided_slice %1 {offsets = [0, 5], sizes = [8, 1], strides = [1, 1]} : vector<8x9xf32> to vector<8x1xf32>
    %49 = vector.broadcast %48 : vector<8x1xf32> to vector<8x256xf32>
    %50 = arith.mulf %49, %0 : vector<8x256xf32>
    %51 = arith.addf %47, %50 : vector<8x256xf32>
    %52 = vector.extract_strided_slice %1 {offsets = [0, 8], sizes = [8, 1], strides = [1, 1]} : vector<8x9xf32> to vector<8x1xf32>
    %53 = vector.broadcast %52 : vector<8x1xf32> to vector<8x256xf32>
    %54 = arith.mulf %53, %22 : vector<8x256xf32>
    %55 = arith.addf %51, %54 : vector<8x256xf32>
    %56 = vector.broadcast %2 : vector<8x1xf32> to vector<8x256xf32>
    %57 = arith.addf %0, %56 : vector<8x256xf32>
    %58 = arith.addf %57, %33 : vector<8x256xf32>
    %c1_i32_10 = arith.constant 1 : i32
    %59 = tpu.dynamic_rotate %44 by %c1_i32_10 dim 1 : vector<8x256xf32>, i32 -> vector<8x256xf32>
    %cst_11 = arith.constant 0.000000e+00 : f32
    %60 = vector.shape_cast %6 : vector<1x256xi1> to vector<1x256xi1>
    %61 = vector.broadcast %60 : vector<1x256xi1> to vector<8x256xi1>
    %62 = vector.broadcast %cst_11 : f32 to vector<8x256xf32>
    %63 = arith.select %61, %59, %62 : vector<8x256xi1>, vector<8x256xf32>
    %64 = arith.addf %58, %63 : vector<8x256xf32>
    %c255_i32 = arith.constant 255 : i32
    %65 = tpu.dynamic_rotate %55 by %c255_i32 dim 1 : vector<8x256xf32>, i32 -> vector<8x256xf32>
    %cst_12 = arith.constant 0.000000e+00 : f32
    %66 = vector.shape_cast %8 : vector<1x256xi1> to vector<1x256xi1>
    %67 = vector.broadcast %66 : vector<1x256xi1> to vector<8x256xi1>
    %68 = vector.broadcast %cst_12 : f32 to vector<8x256xf32>
    %69 = arith.select %67, %65, %68 : vector<8x256xi1>, vector<8x256xf32>
    %70 = arith.addf %64, %69 : vector<8x256xf32>
    %c0_13 = arith.constant 0 : index
    %c0_14 = arith.constant 0 : index
    %71 = vector.load %arg5[%c0_13, %c0_14] : memref<8x256xf32, #tpu.memory_space<vmem>>, vector<8x256xf32>
    tpu.vector_store %arg5[%c0_13, %c0_14], %70 {strides = array<i32>} : memref<8x256xf32, #tpu.memory_space<vmem>>, vector<8x256xf32>,
    return
  }
  func.func @transform_0(%arg0: i32) -> (i32, i32) {
    %c0_i32 = arith.constant 0 : i32
    %c0_i32_0 = arith.constant 0 : i32
    return %arg0, %c0_i32 : i32, i32
  }
  func.func @transform_1(%arg0: i32) -> (i32, i32) {
    %c0_i32 = arith.constant 0 : i32
    %c0_i32_0 = arith.constant 0 : i32
    return %arg0, %c0_i32 : i32, i32
  }
  func.func @transform_2(%arg0: i32) -> (i32, i32) {
    %c0_i32 = arith.constant 0 : i32
    %c0_i32_0 = arith.constant 0 : i32
    return %arg0, %c0_i32 : i32, i32
  }
  func.func @transform_3(%arg0: i32) -> (i32, i32) {
    %c0_i32 = arith.constant 0 : i32
    %c0_i32_0 = arith.constant 0 : i32
    %c0_i32_1 = arith.constant 0 : i32
    return %c0_i32, %c0_i32_0 : i32, i32
  }
  func.func @transform_4(%arg0: i32) -> (i32, i32) {
    %c0_i32 = arith.constant 0 : i32
    %c0_i32_0 = arith.constant 0 : i32
    return %arg0, %c0_i32 : i32, i32
  }
}

</mosaic_0001>

<llo_original>
// kernel: residual_dwconv_bn.1
$region0: #{residual_dwconv_bn.1}
  #allocation0 [shape = 'u32[]', space=smem, size = 0x4, offset = 0x4, fixed_abs, tag = 'smem constant byte address 0x4 - core index']
  #allocation1 [shape = 'u32[144,128]{1,0:T(1,128)}', space=vmem, size = 0x12000, scoped, tag = 'internal scratch']
  %s0 = inlined_call_operand.vmem [shape: f32[8,256], index: 0, kind: input, shape index: {}]
  %s1 = inlined_call_operand.vmem [shape: f32[8,9], index: 1, kind: input, shape index: {}]
  %s2 = inlined_call_operand.vmem [shape: f32[8,1], index: 2, kind: input, shape index: {}]
  %s3 = inlined_call_operand.vmem [shape: s32[1,256], index: 3, kind: input, shape index: {}]
  %s4 = inlined_call_operand.vmem [shape: f32[8,256], index: 4, kind: output, shape index: {}]
  %s5 = sld [smem:[#allocation0]]
  $region26: #{residual_dwconv_bn.1} parent=0
    _
  %s7 = ssub.s32 1, %s5
  %s8 = scalar_select 0, %s7, %s5
  // Predicated region
  $region2: #{residual_dwconv_bn.1} parent=0 // pred_check
    _
  $region3: #{residual_dwconv_bn.1} parent=0 // pred_check_branch
    %10 = sbr.rel (0) target = $region5
  $region4: #{residual_dwconv_bn.1} parent=0 // pred_region
    _
  $region5: #{residual_dwconv_bn.1} parent=0 // pred_fallthru
    _
  // Predicated region
  $region6: #{residual_dwconv_bn.1} parent=0 // pred_check
    _
  $region7: #{residual_dwconv_bn.1} parent=0 // pred_check_branch
    %12 = sbr.rel (0) target = $region9
  $region8: #{residual_dwconv_bn.1} parent=0 // pred_region
    _
  $region9: #{residual_dwconv_bn.1} parent=0 // pred_fallthru
    _
  // Predicated region
  $region10: #{residual_dwconv_bn.1} parent=0 // pred_check
    _
  $region11: #{residual_dwconv_bn.1} parent=0 // pred_check_branch
    %14 = sbr.rel (0) target = $region13
  $region12: #{residual_dwconv_bn.1} parent=0 // pred_region
    _
  $region13: #{residual_dwconv_bn.1} parent=0 // pred_fallthru
    _
  // Predicated region
  $region14: #{residual_dwconv_bn.1} parent=0 // pred_check
    _
  $region15: #{residual_dwconv_bn.1} parent=0 // pred_check_branch
    %16 = sbr.rel (0) target = $region17
  $region16: #{residual_dwconv_bn.1} parent=0 // pred_region
    _
  $region17: #{residual_dwconv_bn.1} parent=0 // pred_fallthru
    _
  %v17 = vld [vmem:[%s0] sm:$0xff]
  %v18 = vld [vmem:[%s0 + $0x8] sm:$0xff]
  %v19 = vld [vmem:[%s1] sm:$0xff]
  %v20 = vld [vmem:[%s2] sm:$0xff]
  %v21 = vld [vmem:[%s3] sm:$0x3]
  %v22 = vlaneseq
  %v23 = vand.u32 %v22, 127
  %v24 = vadd.s32 %v23, 128
  %vm25 = vcmp.ge.s32.totalorder %v21, 1
  %vm26 = vcmp.le.s32.totalorder %v21, 14
  %vm27 = vcmp.ge.s32.totalorder %v23, 16
  %vm28 = vcmp.ge.s32.totalorder %v24, 16
  %vm29 = vcmp.lt.s32.totalorder %v23, 240
  %vm30 = vcmp.lt.s32.totalorder %v24, 240
  %31 = vrot.lane.b32.xlu0 %v17, 16
  %v32 = vpop.permute.xlu0 %31
  %33 = vrot.lane.b32.xlu0 %v18, 16
  %v34 = vpop.permute.xlu0 %33
  %vm35 = vcmp.lt.s32.totalorder %v23, 16
  %v36 = vsel %vm35, %v32, %v34
  %v37 = vsel %vm35, %v34, %v32
  %v38 = vsel %vm27, 1, 0
  %v39 = vsel %vm28, 1, 0
  %vm40 = vcmp.eq.s32.totalorder %v38, 1
  %vm41 = vcmp.eq.s32.totalorder %v39, 1
  %v42 = vsel %vm40, %v37, 0.0
  %v43 = vsel %vm41, %v36, 0.0
  %44 = vrot.lane.b32.xlu0 %v17, 112
  %v45 = vpop.permute.xlu0 %44
  %46 = vrot.lane.b32.xlu0 %v18, 112
  %v47 = vpop.permute.xlu0 %46
  %vm48 = vcmp.lt.s32.totalorder %v23, 112
  %v49 = vsel %vm48, %v45, %v47
  %v50 = vsel %vm48, %v47, %v45
  %v51 = vsel %vm29, 1, 0
  %v52 = vsel %vm30, 1, 0
  %vm53 = vcmp.eq.s32.totalorder %v51, 1
  %vm54 = vcmp.eq.s32.totalorder %v52, 1
  %v55 = vsel %vm53, %v49, 0.0
  %v56 = vsel %vm54, %v50, 0.0
  %58 = vset.pattern.permute.xlu0 1
  %59 = vperm.xlu0 %58, %v19
  %v60 = vpop.permute.xlu0 %59
  %v62 = vmul.f32 %v60, %v42
  %v63 = vmul.f32 %v60, %v43
  %64 = vset.pattern.permute.xlu0 4
  %65 = vperm.xlu0 %64, %v19
  %v66 = vpop.permute.xlu0 %65
  %v68 = vmul.f32 %v66, %v17
  %v69 = vmul.f32 %v66, %v18
  %v70 = vadd.f32 %v62, %v68
  %v71 = vadd.f32 %v63, %v69
  %72 = vset.pattern.permute.xlu0 7
  %73 = vperm.xlu0 %72, %v19
  %v74 = vpop.permute.xlu0 %73
  %v76 = vmul.f32 %v74, %v55
  %v77 = vmul.f32 %v74, %v56
  %v78 = vadd.f32 %v70, %v76
  %v79 = vadd.f32 %v71, %v77
  %80 = vset.pattern.permute.xlu0 0
  %81 = vperm.xlu0 %80, %v19
  %v82 = vpop.permute.xlu0 %81
  %v84 = vmul.f32 %v82, %v42
  %v85 = vmul.f32 %v82, %v43
  %86 = vset.pattern.permute.xlu0 3
  %87 = vperm.xlu0 %86, %v19
  %v88 = vpop.permute.xlu0 %87
  %v90 = vmul.f32 %v88, %v17
  %v91 = vmul.f32 %v88, %v18
  %v92 = vadd.f32 %v84, %v90
  %v93 = vadd.f32 %v85, %v91
  %94 = vset.pattern.permute.xlu0 6
  %95 = vperm.xlu0 %94, %v19
  %v96 = vpop.permute.xlu0 %95
  %v98 = vmul.f32 %v96, %v55
  %v99 = vmul.f32 %v96, %v56
  %v100 = vadd.f32 %v92, %v98
  %v101 = vadd.f32 %v93, %v99
  %102 = vset.pattern.permute.xlu0 2
  %103 = vperm.xlu0 %102, %v19
  %v104 = vpop.permute.xlu0 %103
  %v106 = vmul.f32 %v104, %v42
  %v107 = vmul.f32 %v104, %v43
  %108 = vset.pattern.permute.xlu0 5
  %109 = vperm.xlu0 %108, %v19
  %v110 = vpop.permute.xlu0 %109
  %v112 = vmul.f32 %v110, %v17
  %v113 = vmul.f32 %v110, %v18
  %v114 = vadd.f32 %v106, %v112
  %v115 = vadd.f32 %v107, %v113
  %116 = vset.pattern.permute.xlu0 8
  %117 = vperm.xlu0 %116, %v19
  %v118 = vpop.permute.xlu0 %117
  %v120 = vmul.f32 %v118, %v55
  %v121 = vmul.f32 %v118, %v56
  %v122 = vadd.f32 %v114, %v120
  %v123 = vadd.f32 %v115, %v121
  %125 = vset.pattern.permute.xlu0 0
  %126 = vperm.xlu0 %125, %v20
  %v127 = vpop.permute.xlu0 %126
  %v129 = vadd.f32 %v17, %v127
  %v130 = vadd.f32 %v18, %v127
  %v131 = vadd.f32 %v129, %v78
  %v132 = vadd.f32 %v130, %v79
  %133 = vrot.lane.b32.xlu0 %v100, 1
  %v134 = vpop.permute.xlu0 %133
  %135 = vrot.lane.b32.xlu0 %v101, 1
  %v136 = vpop.permute.xlu0 %135
  %vm137 = vcmp.lt.s32.totalorder %v23, 1
  %v138 = vsel %vm137, %v134, %v136
  %v139 = vsel %vm137, %v136, %v134
  %v140 = vsel %vm25, 1, 0
  %v141 = vlaneseq
  %v142 = vshrl.u32 %v141, 7
  %v143 = vsub.s32 0, %v142
  %v144 = vrot.slane %v140, %v143
  %v145 = vlaneseq
  %v146 = vshrl.u32 %v145, 7
  %v147 = vsub.s32 1, %v146
  %v148 = vrot.slane %v140, %v147
  %vm149 = vcmp.eq.s32.totalorder %v144, 1
  %vm150 = vcmp.eq.s32.totalorder %v148, 1
  %v151 = vsel %vm149, %v139, 0.0
  %v152 = vsel %vm150, %v138, 0.0
  %v153 = vadd.f32 %v131, %v151
  %v154 = vadd.f32 %v132, %v152
  %155 = vrot.lane.b32.xlu0 %v122, 127
  %v156 = vpop.permute.xlu0 %155
  %157 = vrot.lane.b32.xlu0 %v123, 127
  %v158 = vpop.permute.xlu0 %157
  %vm159 = vcmp.lt.s32.totalorder %v23, 127
  %v160 = vsel %vm159, %v156, %v158
  %v161 = vsel %vm159, %v158, %v156
  %v162 = vsel %vm26, 1, 0
  %v163 = vlaneseq
  %v164 = vshrl.u32 %v163, 7
  %v165 = vsub.s32 0, %v164
  %v166 = vrot.slane %v162, %v165
  %v167 = vlaneseq
  %v168 = vshrl.u32 %v167, 7
  %v169 = vsub.s32 1, %v168
  %v170 = vrot.slane %v162, %v169
  %vm171 = vcmp.eq.s32.totalorder %v166, 1
  %vm172 = vcmp.eq.s32.totalorder %v170, 1
  %v173 = vsel %vm171, %v160, 0.0
  %v174 = vsel %vm172, %v161, 0.0
  %v175 = vadd.f32 %v153, %v173
  %v176 = vadd.f32 %v154, %v174
  %177 = vst [vmem:[%s4] sm:$0xff] %v175
  %178 = vst [vmem:[%s4 + $0x8] sm:$0xff] %v176
  // Predicated region
  $region18: #{residual_dwconv_bn.1} parent=0 // pred_check
    _
  $region19: #{residual_dwconv_bn.1} parent=0 // pred_check_branch
    %180 = sbr.rel (0) target = $region21
  $region20: #{residual_dwconv_bn.1} parent=0 // pred_region
    _
  $region21: #{residual_dwconv_bn.1} parent=0 // pred_fallthru
    _
  // Predicated region
  $region22: #{residual_dwconv_bn.1} parent=0 // pred_check
    _
  $region23: #{residual_dwconv_bn.1} parent=0 // pred_check_branch
    %182 = sbr.rel (0) target = $region25
  $region24: #{residual_dwconv_bn.1} parent=0 // pred_region
    _
  $region25: #{residual_dwconv_bn.1} parent=0 // pred_fallthru
    _

</llo_original>
